<compile_context>
chip_gen: v6e
topology: v6e:2x2x1
jax: 0.10.0
libtpu: 0.0.40
codegen_flags: <defaults>
</compile_context>

<pallas_src>
import jax
import jax.numpy as jnp
from jax.experimental import pallas as pl
from jax.experimental.pallas import tpu as pltpu


def _pos_enc_kernel(x_ref,
                    w1_ref, b1_ref,
                    w2_ref, b2_ref,
                    w3_ref, b3_ref,
                    o_ref):
    # x_ref: (2, tn) tile of tokens (channel-major); weights are full arrays.
    x = x_ref[...].astype(jnp.float32)                      # (2, tn)

    # Layer 1: Conv1d(2->32) + folded BN + ReLU.
    # K=2 matmul wastes the MXU; do it as two broadcast FMAs on the VPU.
    w1 = w1_ref[...]                                        # (32, 2) f32
    h1 = w1[:, 0:1] * x[0:1, :] + w1[:, 1:2] * x[1:2, :] + b1_ref[...]
    h1 = jnp.maximum(h1, 0.0)                               # (32, tn) f32

    # Layer 2: Conv1d(32->64) + folded BN + ReLU (MXU, bf16 in / f32 acc).
    h2 = jnp.dot(w2_ref[...], h1.astype(w2_ref.dtype),
                 preferred_element_type=jnp.float32) + b2_ref[...]
    h2 = jnp.maximum(h2, 0.0)                               # (64, tn) f32

    # Layer 3: Conv1d(64->C) (MXU, bf16 in / f32 acc).
    out = jnp.dot(w3_ref[...], h2.astype(w3_ref.dtype),
                  preferred_element_type=jnp.float32) + b3_ref[...]
    # Cast fused into the store (bf16 writeback recommended on v6e/v7x).
    o_ref[...] = out.astype(o_ref.dtype)                    # (C, tn)


def position_encoder_pallas(x_bcn, folded_params, *, tn=8192, out_dtype=None,
                            vmem_limit_bytes=48 * 1024 * 1024):
    """x_bcn: (B, 2, N) in PyTorch Conv1d layout.  Returns (B, C, N)."""
    B, Cin, N = x_bcn.shape
    assert Cin == 2
    assert tn % 128 == 0, "token tile must be lane-aligned (multiple of 128)"
    w1, b1, w2, b2, w3, b3 = folded_params
    C = w3.shape[0]
    out_dtype = out_dtype if out_dtype is not None else x_bcn.dtype

    # Token tile: full extent for tiny N (no masking), otherwise the largest
    # lane-aligned tile <= min(tn, N); the ragged last block is masked by
    # Pallas (safe: no reduction over the token/lane dimension).
    if N < 128:
        tn_eff = N
    else:
        tn_eff = min(tn, (N // 128) * 128)
    n_tiles = pl.cdiv(N, tn_eff)

    # Constant index_map -> weights DMA'd once and stay VMEM-resident.
    full = lambda a: pl.BlockSpec(a.shape, lambda j, b: (0, 0))

    return pl.pallas_call(
        _pos_enc_kernel,
        out_shape=jax.ShapeDtypeStruct((B, C, N), out_dtype),
        grid_spec=pltpu.PrefetchScalarGridSpec(
            num_scalar_prefetch=0,
            # Token tiles lead the grid -> balanced split across v7x's 2 TCs
            # even when B is 1 / odd.  Both axes are independent (parallel).
            grid=(n_tiles, B),
            in_specs=[
                pl.BlockSpec((None, Cin, tn_eff), lambda j, b: (b, 0, j)),
                full(w1), full(b1),
                full(w2), full(b2),
                full(w3), full(b3),
            ],
            out_specs=pl.BlockSpec((None, C, tn_eff), lambda j, b: (b, 0, j)),
        ),
        compiler_params=pltpu.CompilerParams(
            dimension_semantics=("parallel", "parallel"),
            # 48 MiB: keeps double-buffering at tn=8192 and fits v7x's 64 MiB
            # physical VMEM (v5e/v6e have 128 MiB, so this is also safe there).
            vmem_limit_bytes=vmem_limit_bytes,
        ),
    )(x_bcn, w1, b1, w2, b2, w3, b3)


def make_raw_params(channels, key):
    """Deterministic synthetic parameters matching the PyTorch module shapes."""
    ks = jax.random.split(key, 14)

    def conv(kw, kb, cin, cout):
        w = 0.1 * jax.random.normal(kw, (cout, cin), jnp.float32)  # (cout,cin,1) squeezed
        b = 0.05 * jax.random.normal(kb, (cout,), jnp.float32)
        return w, b

    def bn(kg, kb, km, kv, c):
        gamma = 1.0 + 0.05 * jax.random.normal(kg, (c,), jnp.float32)
        beta = 0.05 * jax.random.normal(kb, (c,), jnp.float32)
        mean = 0.05 * jax.random.normal(km, (c,), jnp.float32)
        var = 1.0 + 0.1 * jnp.abs(jax.random.normal(kv, (c,), jnp.float32))
        return gamma, beta, mean, var

    w1, b1 = conv(ks[0], ks[1], 2, 32)
    g1, be1, m1, v1 = bn(ks[2], ks[3], ks[4], ks[5], 32)
    w2, b2 = conv(ks[6], ks[7], 32, 64)
    g2, be2, m2, v2 = bn(ks[8], ks[9], ks[10], ks[11], 64)
    w3, b3 = conv(ks[12], ks[13], 64, channels)
    return (w1, b1, g1, be1, m1, v1, w2, b2, g2, be2, m2, v2, w3, b3)


def fold_params(raw, eps=1e-5, mxu_dtype=jnp.bfloat16):
    """Fold eval-mode BatchNorm into the preceding Conv1d weights/biases.

    MXU weights (layers 2/3) are pre-cast to `mxu_dtype` (bf16 by default);
    biases and the layer-1 (VPU) weights stay f32.
    """
    (w1, b1, g1, be1, m1, v1, w2, b2, g2, be2, m2, v2, w3, b3) = raw

    def fold(w, b, g, be, m, v):
        s = g / jnp.sqrt(v + eps)                    # (cout,)
        wf = w * s[:, None]                          # (cout, cin)
        bf = (b - m) * s + be                        # (cout,)
        return wf, bf[:, None]                       # bias as (cout, 1)

    w1f, b1f = fold(w1, b1, g1, be1, m1, v1)
    w2f, b2f = fold(w2, b2, g2, be2, m2, v2)
    return (w1f, b1f,
            w2f.astype(mxu_dtype), b2f,
            w3.astype(mxu_dtype), b3[:, None])


def position_encoder_ref(x_bcn, raw, eps=1e-5):
    """Pure-JAX f32 reference using UNFOLDED params (checks kernel + BN fold)."""
    (w1, b1, g1, be1, m1, v1, w2, b2, g2, be2, m2, v2, w3, b3) = raw

    def conv(x, w, b):                               # x: (B, cin, N), w: (cout, cin)
        return jnp.einsum('oi,bin->bon', w, x) + b[None, :, None]

    def bn(x, g, be, m, v):
        inv = g / jnp.sqrt(v + eps)
        return (x - m[None, :, None]) * inv[None, :, None] + be[None, :, None]

    h = jnp.maximum(bn(conv(x_bcn, w1, b1), g1, be1, m1, v1), 0.0)
    h = jnp.maximum(bn(conv(h, w2, b2), g2, be2, m2, v2), 0.0)
    return conv(h, w3, b3)


if __name__ == "__main__":
    key = jax.random.PRNGKey(0)
    kx, kp, kx2, kp2 = jax.random.split(key, 4)

    # --- Case 1: small shapes, f32 end-to-end (tight check of kernel + BN fold)
    B, N, channels = 2, 16, 128
    x = jax.random.normal(kx, (B, 2, N), jnp.float32)
    raw = make_raw_params(channels, kp)
    ref = position_encoder_ref(x, raw)

    folded_f32 = fold_params(raw, mxu_dtype=jnp.float32)
    out = jax.block_until_ready(position_encoder_pallas(x, folded_f32))
    assert out.shape == (B, channels, N)
    assert bool(jnp.allclose(out, ref, atol=1e-4, rtol=1e-4)), "f32 mismatch"

    # --- Case 2: bf16 MXU weights + bf16 writeback (recommended v6e/v7x config)
    folded_bf16 = fold_params(raw)                       # bf16 MXU weights
    out_bf16 = jax.block_until_ready(
        position_encoder_pallas(x, folded_bf16, out_dtype=jnp.bfloat16))
    assert out_bf16.dtype == jnp.bfloat16
    assert bool(jnp.allclose(out_bf16.astype(jnp.float32), ref,
                             atol=2e-2, rtol=2e-2)), "bf16 mismatch"

    # --- Case 3: ragged N (exercises cdiv grid + masked edge block), bf16 MXU
    B2, N2, channels2 = 2, 200, 64
    x2 = jax.random.normal(kx2, (B2, 2, N2), jnp.float32)
    raw2 = make_raw_params(channels2, kp2)
    ref2 = position_encoder_ref(x2, raw2)
    out2 = jax.block_until_ready(
        position_encoder_pallas(x2, fold_params(raw2)))
    assert out2.shape == (B2, channels2, N2)
    assert bool(jnp.allclose(out2, ref2, atol=1e-2, rtol=1e-2)), "ragged mismatch"

    print("KERNEL_OK")
</pallas_src>

<mosaic_0001>
module attributes {stable_mosaic.version = 11 : i64} {
  func.func @_pos_enc_kernel(%arg0: i32, %arg1: i32, %arg2: memref<1x2x16xf32, #tpu.memory_space<vmem>>, %arg3: memref<32x2xf32, #tpu.memory_space<vmem>>, %arg4: memref<32x1xf32, #tpu.memory_space<vmem>>, %arg5: memref<64x32xf32, #tpu.memory_space<vmem>>, %arg6: memref<64x1xf32, #tpu.memory_space<vmem>>, %arg7: memref<128x64xf32, #tpu.memory_space<vmem>>, %arg8: memref<128x1xf32, #tpu.memory_space<vmem>>, %arg9: memref<1x128x16xf32, #tpu.memory_space<vmem>>) attributes {dimension_semantics = [#tpu.dimension_semantics<parallel>, #tpu.dimension_semantics<parallel>], iteration_bounds = array<i64: 1, 2>, scalar_prefetch = 0 : i64, scratch_operands = 0 : i64, tpu.core_type = #tpu.core_type<tc>, window_params = [{transform_indices = @transform_0, window_bounds = array<i64: 1, 2, 16>}, {pipeline_mode = #tpu.pipeline_mode<synchronous>, transform_indices = @transform_1, window_bounds = array<i64: 32, 2>}, {pipeline_mode = #tpu.pipeline_mode<synchronous>, transform_indices = @transform_2, window_bounds = array<i64: 32, 1>}, {pipeline_mode = #tpu.pipeline_mode<synchronous>, transform_indices = @transform_3, window_bounds = array<i64: 64, 32>}, {pipeline_mode = #tpu.pipeline_mode<synchronous>, transform_indices = @transform_4, window_bounds = array<i64: 64, 1>}, {pipeline_mode = #tpu.pipeline_mode<synchronous>, transform_indices = @transform_5, window_bounds = array<i64: 128, 64>}, {pipeline_mode = #tpu.pipeline_mode<synchronous>, transform_indices = @transform_6, window_bounds = array<i64: 128, 1>}, {transform_indices = @transform_7, window_bounds = array<i64: 1, 128, 16>}]} {
    %c0 = arith.constant 0 : index
    %c0_0 = arith.constant 0 : index
    %c0_1 = arith.constant 0 : index
    %0 = vector.load %arg2[%c0, %c0_0, %c0_1] : memref<1x2x16xf32, #tpu.memory_space<vmem>>, vector<1x2x16xf32>
    %1 = vector.shape_cast %0 : vector<1x2x16xf32> to vector<2x16xf32>
    %c0_2 = arith.constant 0 : index
    %c0_3 = arith.constant 0 : index
    %2 = vector.load %arg3[%c0_2, %c0_3] : memref<32x2xf32, #tpu.memory_space<vmem>>, vector<32x2xf32>
    %3 = vector.extract_strided_slice %2 {offsets = [0, 0], sizes = [32, 1], strides = [1, 1]} : vector<32x2xf32> to vector<32x1xf32>
    %4 = vector.extract_strided_slice %1 {offsets = [0, 0], sizes = [1, 16], strides = [1, 1]} : vector<2x16xf32> to vector<1x16xf32>
    %5 = vector.broadcast %3 : vector<32x1xf32> to vector<32x16xf32>
    %6 = vector.broadcast %4 : vector<1x16xf32> to vector<32x16xf32>
    %7 = arith.mulf %5, %6 : vector<32x16xf32>
    %8 = vector.extract_strided_slice %2 {offsets = [0, 1], sizes = [32, 1], strides = [1, 1]} : vector<32x2xf32> to vector<32x1xf32>
    %9 = vector.extract_strided_slice %1 {offsets = [1, 0], sizes = [1, 16], strides = [1, 1]} : vector<2x16xf32> to vector<1x16xf32>
    %10 = vector.broadcast %8 : vector<32x1xf32> to vector<32x16xf32>
    %11 = vector.broadcast %9 : vector<1x16xf32> to vector<32x16xf32>
    %12 = arith.mulf %10, %11 : vector<32x16xf32>
    %13 = arith.addf %7, %12 : vector<32x16xf32>
    %c0_4 = arith.constant 0 : index
    %c0_5 = arith.constant 0 : index
    %14 = vector.load %arg4[%c0_4, %c0_5] : memref<32x1xf32, #tpu.memory_space<vmem>>, vector<32x1xf32>
    %15 = vector.broadcast %14 : vector<32x1xf32> to vector<32x16xf32>
    %16 = arith.addf %13, %15 : vector<32x16xf32>
    %cst = arith.constant 0.000000e+00 : f32
    %17 = vector.broadcast %cst : f32 to vector<32x16xf32>
    %18 = arith.maximumf %16, %17 : vector<32x16xf32>
    %c0_6 = arith.constant 0 : index
    %c0_7 = arith.constant 0 : index
    %19 = vector.load %arg5[%c0_6, %c0_7] : memref<64x32xf32, #tpu.memory_space<vmem>>, vector<64x32xf32>
    %cst_8 = arith.constant dense<0.000000e+00> : vector<64x16xf32>
    %20 = tpu.matmul %19, %18, %cst_8 {dimension_numbers = #tpu.dot_dimension_numbers<[1], [0], [0], [1], [0, 0, 1, 1], [], []>} : vector<64x32xf32>, vector<32x16xf32>, vector<64x16xf32> -> vector<64x16xf32>
    %c0_9 = arith.constant 0 : index
    %c0_10 = arith.constant 0 : index
    %21 = vector.load %arg6[%c0_9, %c0_10] : memref<64x1xf32, #tpu.memory_space<vmem>>, vector<64x1xf32>
    %22 = vector.broadcast %21 : vector<64x1xf32> to vector<64x16xf32>
    %23 = arith.addf %20, %22 : vector<64x16xf32>
    %cst_11 = arith.constant 0.000000e+00 : f32
    %24 = vector.broadcast %cst_11 : f32 to vector<64x16xf32>
    %25 = arith.maximumf %23, %24 : vector<64x16xf32>
    %c0_12 = arith.constant 0 : index
    %c0_13 = arith.constant 0 : index
    %26 = vector.load %arg7[%c0_12, %c0_13] : memref<128x64xf32, #tpu.memory_space<vmem>>, vector<128x64xf32>
    %cst_14 = arith.constant dense<0.000000e+00> : vector<128x16xf32>
    %27 = tpu.matmul %26, %25, %cst_14 {dimension_numbers = #tpu.dot_dimension_numbers<[1], [0], [0], [1], [0, 0, 1, 1], [], []>} : vector<128x64xf32>, vector<64x16xf32>, vector<128x16xf32> -> vector<128x16xf32>
    %c0_15 = arith.constant 0 : index
    %c0_16 = arith.constant 0 : index
    %28 = vector.load %arg8[%c0_15, %c0_16] : memref<128x1xf32, #tpu.memory_space<vmem>>, vector<128x1xf32>
    %29 = vector.broadcast %28 : vector<128x1xf32> to vector<128x16xf32>
    %30 = arith.addf %27, %29 : vector<128x16xf32>
    %c0_17 = arith.constant 0 : index
    %c0_18 = arith.constant 0 : index
    %c0_19 = arith.constant 0 : index
    %31 = vector.load %arg9[%c0_17, %c0_18, %c0_19] : memref<1x128x16xf32, #tpu.memory_space<vmem>>, vector<1x128x16xf32>
    %32 = vector.shape_cast %31 : vector<1x128x16xf32> to vector<128x16xf32>
    %33 = vector.shape_cast %30 : vector<128x16xf32> to vector<1x128x16xf32>
    tpu.vector_store %arg9[%c0_17, %c0_18, %c0_19], %33 {strides = array<i32>} : memref<1x128x16xf32, #tpu.memory_space<vmem>>, vector<1x128x16xf32>,
    return
  }
  func.func @transform_0(%arg0: i32, %arg1: i32) -> (i32, i32, i32) {
    %c0_i32 = arith.constant 0 : i32
    %c0_i32_0 = arith.constant 0 : i32
    return %arg1, %c0_i32, %arg0 : i32, i32, i32
  }
  func.func @transform_1(%arg0: i32, %arg1: i32) -> (i32, i32) {
    %c0_i32 = arith.constant 0 : i32
    %c0_i32_0 = arith.constant 0 : i32
    %c0_i32_1 = arith.constant 0 : i32
    return %c0_i32, %c0_i32_0 : i32, i32
  }
  func.func @transform_2(%arg0: i32, %arg1: i32) -> (i32, i32) {
    %c0_i32 = arith.constant 0 : i32
    %c0_i32_0 = arith.constant 0 : i32
    %c0_i32_1 = arith.constant 0 : i32
    return %c0_i32, %c0_i32_0 : i32, i32
  }
  func.func @transform_3(%arg0: i32, %arg1: i32) -> (i32, i32) {
    %c0_i32 = arith.constant 0 : i32
    %c0_i32_0 = arith.constant 0 : i32
    %c0_i32_1 = arith.constant 0 : i32
    return %c0_i32, %c0_i32_0 : i32, i32
  }
  func.func @transform_4(%arg0: i32, %arg1: i32) -> (i32, i32) {
    %c0_i32 = arith.constant 0 : i32
    %c0_i32_0 = arith.constant 0 : i32
    %c0_i32_1 = arith.constant 0 : i32
    return %c0_i32, %c0_i32_0 : i32, i32
  }
  func.func @transform_5(%arg0: i32, %arg1: i32) -> (i32, i32) {
    %c0_i32 = arith.constant 0 : i32
    %c0_i32_0 = arith.constant 0 : i32
    %c0_i32_1 = arith.constant 0 : i32
    return %c0_i32, %c0_i32_0 : i32, i32
  }
  func.func @transform_6(%arg0: i32, %arg1: i32) -> (i32, i32) {
    %c0_i32 = arith.constant 0 : i32
    %c0_i32_0 = arith.constant 0 : i32
    %c0_i32_1 = arith.constant 0 : i32
    return %c0_i32, %c0_i32_0 : i32, i32
  }
  func.func @transform_7(%arg0: i32, %arg1: i32) -> (i32, i32, i32) {
    %c0_i32 = arith.constant 0 : i32
    %c0_i32_0 = arith.constant 0 : i32
    return %arg1, %c0_i32, %arg0 : i32, i32, i32
  }
}

</mosaic_0001>

<llo_original>
// kernel: tpu_custom_call.1
$region0: #{tpu_custom_call.1}
  #allocation0 [shape = 'u32[]', space=smem, size = 0x4, offset = 0x4, fixed_abs, tag = 'smem constant byte address 0x4 - core index']
  #allocation1 [shape = 'u32[144,128]{1,0:T(1,128)}', space=vmem, size = 0x12000, scoped, tag = 'internal scratch']
  %s0 = inlined_call_operand.vmem [shape: f32[2,2,16], index: 0, kind: input, shape index: {}]
  %s1 = inlined_call_operand.vmem [shape: f32[32,2], index: 1, kind: input, shape index: {}]
  %s2 = inlined_call_operand.vmem [shape: f32[32,1], index: 2, kind: input, shape index: {}]
  %s3 = inlined_call_operand.vmem [shape: f32[64,32], index: 3, kind: input, shape index: {}]
  %s4 = inlined_call_operand.vmem [shape: f32[64,1], index: 4, kind: input, shape index: {}]
  %s5 = inlined_call_operand.vmem [shape: f32[128,64], index: 5, kind: input, shape index: {}]
  %s6 = inlined_call_operand.vmem [shape: f32[128,1], index: 6, kind: input, shape index: {}]
  %s7 = inlined_call_operand.vmem [shape: f32[2,128,16], index: 7, kind: output, shape index: {}]
  %s8 = sld [smem:[#allocation0]]
  $region61: #{tpu_custom_call.1} parent=0
    _
  %s10 = ssub.s32 1, %s8
  %s11 = scalar_select 0, %s10, %s8
  loop: start=0, step=1, limit=4
  $region2: #{tpu_custom_call.1} parent=0 // loop_pre_header
    _
  $region3: #{tpu_custom_call.1} parent=0 // loop_header
    %s13 = sphi 0, %s17
    %p14 = scmp.ge.s32.totalorder %s13, 4
    %s20 = sphi 0, %s32
    %s21 = sphi 0, %s28
    %s22 = sphi 0, %s20
    %s23 = sphi 0, %s21
    %s24 = sphi 0, %s22
    %s25 = sphi 0, %s23
    %s37 = sphi 0, %s39
    %s40 = sphi 0, %s37
    %s41 = sphi 0, %s40
    %s57 = sphi 0, %s41
    %s61 = sphi 0, %s61
    %s63 = sphi 0, %s61
    %s64 = sphi 0, %s63
    %s78 = sphi 0, %s64
    %s82 = sphi 0, %s82
    %s84 = sphi 0, %s82
    %s85 = sphi 0, %s84
    %s99 = sphi 0, %s85
    %s103 = sphi 0, %s103
    %s105 = sphi 0, %s103
    %s106 = sphi 0, %s105
    %s120 = sphi 0, %s106
    %s124 = sphi 0, %s124
    %s126 = sphi 0, %s124
    %s127 = sphi 0, %s126
    %s141 = sphi 0, %s127
    %s145 = sphi 0, %s145
    %s147 = sphi 0, %s145
    %s148 = sphi 0, %s147
    %s162 = sphi 0, %s148
    %s166 = sphi 0, %s166
    %s168 = sphi 0, %s166
    %s169 = sphi 0, %s168
    %s183 = sphi 0, %s169
    %s191 = sphi 0, %s193
    %s194 = sphi 0, %s191
    %s195 = sphi 0, %s194
    %s211 = sphi 0, %s195
  $region4: #{tpu_custom_call.1} parent=0 // loop_header_branch
    %16 = sbr.rel (%p14) target = $region8
  $region5: #{tpu_custom_call.1} parent=0 // loop_body
    %s18 = ssub.s32 %s13, 1
    %s19 = ssub.s32 %s13, 2
    %s26 = sadd.s32 1, %s21
    %p27 = scmp.ge.s32.totalorder %s26, 2
    %s28 = scalar_select %p27, 0, %s26
    %s29 = sadd.s32 1, %s20
    %s30 = scalar_select %p27, %s29, %s20
    %p31 = scmp.ge.s32.totalorder %s30, 1
    %s32 = scalar_select %p31, 0, %s30
    %s33 = ssub.s32 %s21, %s28
    %s34 = ssub.s32 %s20, %s32
    %s35 = sor.u32 %s33, %s34
    %p36 = scmp.eq.s32.totalorder %s35, 0
    %s38 = sadd.s32 %s37, 1
    %s39 = scalar_select %p36, %s37, %s38
    %p42 = pneg %p36
    %p43 = scmp.eq.s32.totalorder %s13, 1
    %p44 = por %p42, %p43
    %p45 = scmp.ne.s32.totalorder %s37, %s40
    %p46 = scmp.eq.s32.totalorder %s13, 0
    %p47 = por %p45, %p46
    %p48 = scmp.ne.s32.totalorder %s37, %s40
    %p49 = scmp.eq.s32.totalorder %s18, 1
    %p50 = por %p48, %p49
    %p51 = scmp.ne.s32.totalorder %s40, %s41
    %p52 = scmp.eq.s32.totalorder %s18, 0
    %p53 = por %p51, %p52
    %p54 = scmp.ne.s32.totalorder %s40, %s41
    %p55 = scmp.eq.s32.totalorder %s19, 1
    %p56 = por %p54, %p55
    %p58 = scmp.ne.s32.totalorder %s41, %s57
    %p59 = scmp.eq.s32.totalorder %s19, 0
    %p60 = por %p58, %p59
    %s62 = sadd.s32 %s61, 1
    %p65 = scmp.eq.s32.totalorder %s13, 1
    %p66 = scmp.ne.s32.totalorder %s61, %s63
    %p67 = scmp.eq.s32.totalorder %s13, 0
    %p68 = por %p66, %p67
    %p69 = scmp.ne.s32.totalorder %s61, %s63
    %p70 = scmp.eq.s32.totalorder %s18, 1
    %p71 = por %p69, %p70
    %p72 = scmp.ne.s32.totalorder %s63, %s64
    %p73 = scmp.eq.s32.totalorder %s18, 0
    %p74 = por %p72, %p73
    %p75 = scmp.ne.s32.totalorder %s63, %s64
    %p76 = scmp.eq.s32.totalorder %s19, 1
    %p77 = por %p75, %p76
    %p79 = scmp.ne.s32.totalorder %s64, %s78
    %p80 = scmp.eq.s32.totalorder %s19, 0
    %p81 = por %p79, %p80
    %s83 = sadd.s32 %s82, 1
    %p86 = scmp.eq.s32.totalorder %s13, 1
    %p87 = scmp.ne.s32.totalorder %s82, %s84
    %p88 = scmp.eq.s32.totalorder %s13, 0
    %p89 = por %p87, %p88
    %p90 = scmp.ne.s32.totalorder %s82, %s84
    %p91 = scmp.eq.s32.totalorder %s18, 1
    %p92 = por %p90, %p91
    %p93 = scmp.ne.s32.totalorder %s84, %s85
    %p94 = scmp.eq.s32.totalorder %s18, 0
    %p95 = por %p93, %p94
    %p96 = scmp.ne.s32.totalorder %s84, %s85
    %p97 = scmp.eq.s32.totalorder %s19, 1
    %p98 = por %p96, %p97
    %p100 = scmp.ne.s32.totalorder %s85, %s99
    %p101 = scmp.eq.s32.totalorder %s19, 0
    %p102 = por %p100, %p101
    %s104 = sadd.s32 %s103, 1
    %p107 = scmp.eq.s32.totalorder %s13, 1
    %p108 = scmp.ne.s32.totalorder %s103, %s105
    %p109 = scmp.eq.s32.totalorder %s13, 0
    %p110 = por %p108, %p109
    %p111 = scmp.ne.s32.totalorder %s103, %s105
    %p112 = scmp.eq.s32.totalorder %s18, 1
    %p113 = por %p111, %p112
    %p114 = scmp.ne.s32.totalorder %s105, %s106
    %p115 = scmp.eq.s32.totalorder %s18, 0
    %p116 = por %p114, %p115
    %p117 = scmp.ne.s32.totalorder %s105, %s106
    %p118 = scmp.eq.s32.totalorder %s19, 1
    %p119 = por %p117, %p118
    %p121 = scmp.ne.s32.totalorder %s106, %s120
    %p122 = scmp.eq.s32.totalorder %s19, 0
    %p123 = por %p121, %p122
    %s125 = sadd.s32 %s124, 1
    %p128 = scmp.eq.s32.totalorder %s13, 1
    %p129 = scmp.ne.s32.totalorder %s124, %s126
    %p130 = scmp.eq.s32.totalorder %s13, 0
    %p131 = por %p129, %p130
    %p132 = scmp.ne.s32.totalorder %s124, %s126
    %p133 = scmp.eq.s32.totalorder %s18, 1
    %p134 = por %p132, %p133
    %p135 = scmp.ne.s32.totalorder %s126, %s127
    %p136 = scmp.eq.s32.totalorder %s18, 0
    %p137 = por %p135, %p136
    %p138 = scmp.ne.s32.totalorder %s126, %s127
    %p139 = scmp.eq.s32.totalorder %s19, 1
    %p140 = por %p138, %p139
    %p142 = scmp.ne.s32.totalorder %s127, %s141
    %p143 = scmp.eq.s32.totalorder %s19, 0
    %p144 = por %p142, %p143
    %s146 = sadd.s32 %s145, 1
    %p149 = scmp.eq.s32.totalorder %s13, 1
    %p150 = scmp.ne.s32.totalorder %s145, %s147
    %p151 = scmp.eq.s32.totalorder %s13, 0
    %p152 = por %p150, %p151
    %p153 = scmp.ne.s32.totalorder %s145, %s147
    %p154 = scmp.eq.s32.totalorder %s18, 1
    %p155 = por %p153, %p154
    %p156 = scmp.ne.s32.totalorder %s147, %s148
    %p157 = scmp.eq.s32.totalorder %s18, 0
    %p158 = por %p156, %p157
    %p159 = scmp.ne.s32.totalorder %s147, %s148
    %p160 = scmp.eq.s32.totalorder %s19, 1
    %p161 = por %p159, %p160
    %p163 = scmp.ne.s32.totalorder %s148, %s162
    %p164 = scmp.eq.s32.totalorder %s19, 0
    %p165 = por %p163, %p164
    %s167 = sadd.s32 %s166, 1
    %p170 = scmp.eq.s32.totalorder %s13, 1
    %p171 = scmp.ne.s32.totalorder %s166, %s168
    %p172 = scmp.eq.s32.totalorder %s13, 0
    %p173 = por %p171, %p172
    %p174 = scmp.ne.s32.totalorder %s166, %s168
    %p175 = scmp.eq.s32.totalorder %s18, 1
    %p176 = por %p174, %p175
    %p177 = scmp.ne.s32.totalorder %s168, %s169
    %p178 = scmp.eq.s32.totalorder %s18, 0
    %p179 = por %p177, %p178
    %p180 = scmp.ne.s32.totalorder %s168, %s169
    %p181 = scmp.eq.s32.totalorder %s19, 1
    %p182 = por %p180, %p181
    %p184 = scmp.ne.s32.totalorder %s169, %s183
    %p185 = scmp.eq.s32.totalorder %s19, 0
    %p186 = por %p184, %p185
    %s187 = ssub.s32 %s21, %s28
    %s188 = ssub.s32 %s20, %s32
    %s189 = sor.u32 %s187, %s188
    %p190 = scmp.eq.s32.totalorder %s189, 0
    %s192 = sadd.s32 %s191, 1
    %s193 = scalar_select %p190, %s191, %s192
    %p196 = pneg %p190
    %p197 = scmp.eq.s32.totalorder %s13, 1
    %p198 = por %p196, %p197
    %p199 = scmp.ne.s32.totalorder %s191, %s194
    %p200 = scmp.eq.s32.totalorder %s13, 0
    %p201 = por %p199, %p200
    %p202 = scmp.ne.s32.totalorder %s191, %s194
    %p203 = scmp.eq.s32.totalorder %s18, 1
    %p204 = por %p202, %p203
    %p205 = scmp.ne.s32.totalorder %s194, %s195
    %p206 = scmp.eq.s32.totalorder %s18, 0
    %p207 = por %p205, %p206
    %p208 = scmp.ne.s32.totalorder %s194, %s195
    %p209 = scmp.eq.s32.totalorder %s19, 1
    %p210 = por %p208, %p209
    %p212 = scmp.ne.s32.totalorder %s195, %s211
    %p213 = scmp.eq.s32.totalorder %s19, 0
    %p214 = por %p212, %p213
    %p215 = scmp.le.s32.totalorder 1, %s13
    %p216 = scmp.lt.s32.totalorder %s13, 3
    %p217 = pnand %p215, %p216
    %p218 = pneg %p217
    // Predicated region
    $region9: #{tpu_custom_call.1} parent=5 // pred_check
      _
    $region10: #{tpu_custom_call.1} parent=5 // pred_check_branch
      %220 = sbr.rel (%p217) target = $region12
    $region11: #{tpu_custom_call.1} parent=5 // pred_region
      %s221 = ssub.s32 %s13, 1
      // Predicated region
      $region13: #{tpu_custom_call.1} parent=11 // pred_check
        %p222 = pneg %p74
      $region14: #{tpu_custom_call.1} parent=11 // pred_check_branch
        %224 = sbr.rel (%p222) target = $region16
      $region15: #{tpu_custom_call.1} parent=11 // pred_region
        _
      $region16: #{tpu_custom_call.1} parent=11 // pred_fallthru
        _
      // Predicated region
      $region17: #{tpu_custom_call.1} parent=11 // pred_check
        %p225 = pneg %p95
      $region18: #{tpu_custom_call.1} parent=11 // pred_check_branch
        %227 = sbr.rel (%p225) target = $region20
      $region19: #{tpu_custom_call.1} parent=11 // pred_region
        _
      $region20: #{tpu_custom_call.1} parent=11 // pred_fallthru
        _
      // Predicated region
      $region21: #{tpu_custom_call.1} parent=11 // pred_check
        %p228 = pneg %p116
      $region22: #{tpu_custom_call.1} parent=11 // pred_check_branch
        %230 = sbr.rel (%p228) target = $region24
      $region23: #{tpu_custom_call.1} parent=11 // pred_region
        _
      $region24: #{tpu_custom_call.1} parent=11 // pred_fallthru
        _
      // Predicated region
      $region25: #{tpu_custom_call.1} parent=11 // pred_check
        %p231 = pneg %p137
      $region26: #{tpu_custom_call.1} parent=11 // pred_check_branch
        %233 = sbr.rel (%p231) target = $region28
      $region27: #{tpu_custom_call.1} parent=11 // pred_region
        _
      $region28: #{tpu_custom_call.1} parent=11 // pred_fallthru
        _
      // Predicated region
      $region29: #{tpu_custom_call.1} parent=11 // pred_check
        %p234 = pneg %p158
      $region30: #{tpu_custom_call.1} parent=11 // pred_check_branch
        %236 = sbr.rel (%p234) target = $region32
      $region31: #{tpu_custom_call.1} parent=11 // pred_region
        _
      $region32: #{tpu_custom_call.1} parent=11 // pred_fallthru
        _
      // Predicated region
      $region33: #{tpu_custom_call.1} parent=11 // pred_check
        %p237 = pneg %p179
      $region34: #{tpu_custom_call.1} parent=11 // pred_check_branch
        %239 = sbr.rel (%p237) target = $region36
      $region35: #{tpu_custom_call.1} parent=11 // pred_region
        _
      $region36: #{tpu_custom_call.1} parent=11 // pred_fallthru
        _
    $region12: #{tpu_custom_call.1} parent=5 // pred_fallthru
      _
    %p240 = scmp.lt.s32.totalorder %s13, 2
    // Predicated region
    $region37: #{tpu_custom_call.1} parent=5 // pred_check
      %p241 = pneg %p240
    $region38: #{tpu_custom_call.1} parent=5 // pred_check_branch
      %243 = sbr.rel (%p241) target = $region40
    $region39: #{tpu_custom_call.1} parent=5 // pred_region
      // Predicated region
      $region41: #{tpu_custom_call.1} parent=39 // pred_check
        %p244 = pneg %p47
      $region42: #{tpu_custom_call.1} parent=39 // pred_check_branch
        %246 = sbr.rel (%p244) target = $region44
      $region43: #{tpu_custom_call.1} parent=39 // pred_region
        %p247 = scmp.lt.s32.totalorder %s21, 1
        %s248 = scalar_select %p247, %s21, 1
        %p249 = scmp.lt.s32.totalorder %s20, 0
        %s250 = scalar_select %p249, %s20, 0
        %s251 = sadd.s32 %s250, %s248
        %s252 = smul.addr %s251, 2
        %s253 = scalar_lea.vmem %s0, %s252
      $region44: #{tpu_custom_call.1} parent=39 // pred_fallthru
        _
    $region40: #{tpu_custom_call.1} parent=5 // pred_fallthru
      _
    %p254 = scmp.le.s32.totalorder 1, %s13
    %p255 = scmp.lt.s32.totalorder %s13, 3
    %p256 = pnand %p254, %p255
    %p257 = pneg %p256
    // Predicated region
    $region45: #{tpu_custom_call.1} parent=5 // pred_check
      _
    $region46: #{tpu_custom_call.1} parent=5 // pred_check_branch
      %259 = sbr.rel (%p256) target = $region48
    $region47: #{tpu_custom_call.1} parent=5 // pred_region
      %s260 = ssub.s32 %s13, 1
      %p261 = scmp.lt.s32.totalorder %s23, 1
      %s262 = scalar_select %p261, %s23, 1
      %p263 = scmp.lt.s32.totalorder %s22, 0
      %s264 = scalar_select %p263, %s22, 0
      %s265 = sadd.s32 %s264, %s262
      %s266 = smul.addr %s265, 2
      %s267 = scalar_lea.vmem %s0, %s266
      %p268 = pneg %p53
      %p269 = pneg %p50
      %p270 = pneg %p74
      %p271 = pneg %p71
      %p272 = pneg %p95
      %p273 = pneg %p92
      %p274 = pneg %p116
      %p275 = pneg %p113
      %p276 = pneg %p137
      %p277 = pneg %p134
      %p278 = pneg %p158
      %p279 = pneg %p155
      %p280 = pneg %p179
      %p281 = pneg %p176
      %p282 = pneg %p207
      %p283 = pneg %p204
      %p284 = scmp.lt.s32.totalorder %s23, 1
      %s285 = scalar_select %p284, %s23, 1
      %p286 = scmp.lt.s32.totalorder %s22, 0
      %s287 = scalar_select %p286, %s22, 0
      %s288 = smul.addr %s285, 16
      %s289 = sadd.s32 %s287, %s288
      %s290 = smul.addr %s289, 8
      %s291 = scalar_lea.vmem %s7, %s290
      %p292 = scmp.lt.s32.totalorder %s23, 1
      %s293 = scalar_select %p292, %s23, 1
      %p294 = scmp.lt.s32.totalorder %s22, 0
      %s295 = scalar_select %p294, %s22, 0
      %s296 = sadd.s32 %s295, %s293
      %s297 = smul.addr %s296, 2
      %s298 = scalar_lea.vmem %s0, %s297
      %p299 = scmp.lt.s32.totalorder %s23, 1
      %s300 = scalar_select %p299, %s23, 1
      %p301 = scmp.lt.s32.totalorder %s22, 0
      %s302 = scalar_select %p301, %s22, 0
      %s303 = smul.addr %s300, 16
      %s304 = sadd.s32 %s302, %s303
      %s305 = smul.addr %s304, 8
      %s306 = scalar_lea.vmem %s7, %s305
      %v307 = vld [vmem:[%s298] sm:$0x3]
      %v308 = vld [vmem:[%s1] sm:$0xff]
      %v309 = vld [vmem:[%s1 + $0x8] sm:$0xff]
      %v310 = vld [vmem:[%s1 + $0x10] sm:$0xff]
      %v311 = vld [vmem:[%s1 + $0x18] sm:$0xff]
      %313 = vset.pattern.permute.xlu0 0
      %314 = vperm.xlu0 %313, %v308
      %v315 = vpop.permute.xlu0 %314
      %318 = vset.pattern.permute.xlu0 0
      %319 = vperm.xlu0 %318, %v309
      %v320 = vpop.permute.xlu0 %319
      %323 = vset.pattern.permute.xlu0 0
      %324 = vperm.xlu0 %323, %v310
      %v325 = vpop.permute.xlu0 %324
      %328 = vset.pattern.permute.xlu0 0
      %329 = vperm.xlu0 %328, %v311
      %v330 = vpop.permute.xlu0 %329
      %v332 = vlaneseq
      %v333 = vshrl.u32 %v332, 7
      %v334 = vsub.s32 0, %v333
      %v335 = vrot.slane %v307, %v334
      %v336 = vmul.f32 %v315, %v335
      %v337 = vmul.f32 %v320, %v335
      %v338 = vmul.f32 %v325, %v335
      %v339 = vmul.f32 %v330, %v335
      %340 = vset.pattern.permute.xlu0 1
      %341 = vperm.xlu0 %340, %v308
      %v342 = vpop.permute.xlu0 %341
      %344 = vset.pattern.permute.xlu0 1
      %345 = vperm.xlu0 %344, %v309
      %v346 = vpop.permute.xlu0 %345
      %348 = vset.pattern.permute.xlu0 1
      %349 = vperm.xlu0 %348, %v310
      %v350 = vpop.permute.xlu0 %349
      %352 = vset.pattern.permute.xlu0 1
      %353 = vperm.xlu0 %352, %v311
      %v354 = vpop.permute.xlu0 %353
      %v356 = vlaneseq
      %v357 = vshrl.u32 %v356, 7
      %v358 = vsub.s32 1, %v357
      %v359 = vrot.slane %v307, %v358
      %v360 = vmul.f32 %v342, %v359
      %v361 = vmul.f32 %v346, %v359
      %v362 = vmul.f32 %v350, %v359
      %v363 = vmul.f32 %v354, %v359
      %v364 = vadd.f32 %v336, %v360
      %v365 = vadd.f32 %v337, %v361
      %v366 = vadd.f32 %v338, %v362
      %v367 = vadd.f32 %v339, %v363
      %v368 = vld [vmem:[%s2] sm:$0xff]
      %v369 = vld [vmem:[%s2 + $0x8] sm:$0xff]
      %v370 = vld [vmem:[%s2 + $0x10] sm:$0xff]
      %v371 = vld [vmem:[%s2 + $0x18] sm:$0xff]
      %373 = vset.pattern.permute.xlu0 0
      %374 = vperm.xlu0 %373, %v368
      %v375 = vpop.permute.xlu0 %374
      %378 = vset.pattern.permute.xlu0 0
      %379 = vperm.xlu0 %378, %v369
      %v380 = vpop.permute.xlu0 %379
      %383 = vset.pattern.permute.xlu0 0
      %384 = vperm.xlu0 %383, %v370
      %v385 = vpop.permute.xlu0 %384
      %388 = vset.pattern.permute.xlu0 0
      %389 = vperm.xlu0 %388, %v371
      %v390 = vpop.permute.xlu0 %389
      %v392 = vadd.f32 %v364, %v375
      %v393 = vadd.f32 %v365, %v380
      %v394 = vadd.f32 %v366, %v385
      %v395 = vadd.f32 %v367, %v390
      %v396 = vmax.f32 %v392, 0.0
      %v397 = vmax.f32 %v393, 0.0
      %v398 = vmax.f32 %v394, 0.0
      %v399 = vmax.f32 %v395, 0.0
      %v400 = vld [vmem:[%s3] sm:$0xff]
      %v401 = vld [vmem:[%s3 + $0x8] sm:$0xff]
      %v402 = vld [vmem:[%s3 + $0x10] sm:$0xff]
      %v403 = vld [vmem:[%s3 + $0x18] sm:$0xff]
      %v404 = vld [vmem:[%s3 + $0x20] sm:$0xff]
      %v405 = vld [vmem:[%s3 + $0x28] sm:$0xff]
      %v406 = vld [vmem:[%s3 + $0x30] sm:$0xff]
      %v407 = vld [vmem:[%s3 + $0x38] sm:$0xff]
      %v408 = vld [vmem:[%s4] sm:$0xff]
      %v409 = vld [vmem:[%s4 + $0x8] sm:$0xff]
      %v410 = vld [vmem:[%s4 + $0x10] sm:$0xff]
      %v411 = vld [vmem:[%s4 + $0x18] sm:$0xff]
      %v412 = vld [vmem:[%s4 + $0x20] sm:$0xff]
      %v413 = vld [vmem:[%s4 + $0x28] sm:$0xff]
      %v414 = vld [vmem:[%s4 + $0x30] sm:$0xff]
      %v415 = vld [vmem:[%s4 + $0x38] sm:$0xff]
      %417 = vset.pattern.permute.xlu0 0
      %418 = vperm.xlu0 %417, %v408
      %v419 = vpop.permute.xlu0 %418
      %422 = vset.pattern.permute.xlu0 0
      %423 = vperm.xlu0 %422, %v409
      %v424 = vpop.permute.xlu0 %423
      %427 = vset.pattern.permute.xlu0 0
      %428 = vperm.xlu0 %427, %v410
      %v429 = vpop.permute.xlu0 %428
      %432 = vset.pattern.permute.xlu0 0
      %433 = vperm.xlu0 %432, %v411
      %v434 = vpop.permute.xlu0 %433
      %437 = vset.pattern.permute.xlu0 0
      %438 = vperm.xlu0 %437, %v412
      %v439 = vpop.permute.xlu0 %438
      %442 = vset.pattern.permute.xlu0 0
      %443 = vperm.xlu0 %442, %v413
      %v444 = vpop.permute.xlu0 %443
      %447 = vset.pattern.permute.xlu0 0
      %448 = vperm.xlu0 %447, %v414
      %v449 = vpop.permute.xlu0 %448
      %452 = vset.pattern.permute.xlu0 0
      %453 = vperm.xlu0 %452, %v415
      %v454 = vpop.permute.xlu0 %453
      %vm456 = vcmask 261120
      %v458 = vsel %vm456, %v400, 0
      %v461 = vsel %vm456, %v401, 0
      %v464 = vsel %vm456, %v402, 0
      %v467 = vsel %vm456, %v403, 0
      %v470 = vsel %vm456, %v404, 0
      %v473 = vsel %vm456, %v405, 0
      %v476 = vsel %vm456, %v406, 0
      %v479 = vsel %vm456, %v407, 0
      %481 = vmatprep.subr.mxu0 0.0
      %482 = vmatpush1.msra.mxu0 0.0
      %483 = vmatprep.subr.mxu0 0.0
      %484 = vmatpush1.msra.mxu0 0.0
      %485 = vmatprep.subr.mxu0 0.0
      %486 = vmatpush1.msra.mxu0 0.0
      %487 = vmatprep.subr.mxu0 0.0
      %488 = vmatpush1.msra.mxu0 0.0
      %489 = vmatprep.subr.mxu0 0.0
      %490 = vmatpush1.msra.mxu0 0.0
      %491 = vmatprep.subr.mxu0 0.0
      %492 = vmatpush1.msra.mxu0 0.0
      %493 = vmatprep.subr.mxu0 0.0
      %494 = vmatpush1.msra.mxu0 0.0
      %495 = vmatprep.subr.mxu0 0.0
      %496 = vmatpush1.msra.mxu0 0.0
      %497 = vmatprep.subr.mxu0 0.0
      %498 = vmatpush1.msra.mxu0 0.0
      %499 = vmatprep.subr.mxu0 0.0
      %500 = vmatpush1.msra.mxu0 0.0
      %501 = vmatprep.subr.mxu0 0.0
      %502 = vmatpush1.msra.mxu0 0.0
      %503 = vmatprep.subr.mxu0 0.0
      %504 = vmatpush1.msra.mxu0 0.0
      %505 = vmatprep.subr.mxu0 0.0
      %506 = vmatpush1.msra.mxu0 %v399
      %507 = vmatprep.subr.mxu0 0.0
      %508 = vmatpush1.msra.mxu0 %v398
      %509 = vmatprep.subr.mxu0 0.0
      %510 = vmatpush1.msra.mxu0 %v397
      %511 = vmatprep.subr.mxu0 0.0
      %512 = vmatpush1.msra.mxu0 %v396
      %513 = vmatprep.subr.mxu0 0.0
      %514 = vmatpush2.msra.mxu0 0.0
      %515 = vmatprep.subr.mxu0 0.0
      %516 = vmatpush2.msra.mxu0 0.0
      %517 = vmatprep.subr.mxu0 0.0
      %518 = vmatpush2.msra.mxu0 0.0
      %519 = vmatprep.subr.mxu0 0.0
      %520 = vmatpush2.msra.mxu0 0.0
      %521 = vmatprep.subr.mxu0 0.0
      %522 = vmatpush2.msra.mxu0 0.0
      %523 = vmatprep.subr.mxu0 0.0
      %524 = vmatpush2.msra.mxu0 0.0
      %525 = vmatprep.subr.mxu0 0.0
      %526 = vmatpush2.msra.mxu0 0.0
      %527 = vmatprep.subr.mxu0 0.0
      %528 = vmatpush2.msra.mxu0 0.0
      %529 = vmatprep.subr.mxu0 0.0
      %530 = vmatpush2.msra.mxu0 0.0
      %531 = vmatprep.subr.mxu0 0.0
      %532 = vmatpush2.msra.mxu0 0.0
      %533 = vmatprep.subr.mxu0 0.0
      %534 = vmatpush2.msra.mxu0 0.0
      %535 = vmatprep.subr.mxu0 0.0
      %536 = vmatpush2.msra.mxu0 0.0
      %537 = vmatprep.subr.mxu0 0.0
      %538 = vmatpush2.msra.mxu0 0.0
      %539 = vmatprep.subr.mxu0 0.0
      %540 = vmatpush2.msra.mxu0 0.0
      %541 = vmatprep.subr.mxu0 0.0
      %542 = vmatpush2.msra.mxu0 0.0
      %543 = vmatprep.subr.mxu0 0.0
      %544 = vmatpush2.msra.mxu0 0.0
      %545 = vmatprep.mubr.f32.mxu0 0.0
      %546 = vmatmul.mubr.f32.gmra.mxu0 %v458
      %v547 = vpop.f32.mrf.mxu0
      %v548 = vadd.f32 %v419, %v547
      %v549 = vpop.f32.mrf.mxu0
      %550 = vmatprep.mubr.f32.mxu0 0.0
      %551 = vmatmul.mubr.f32.gmra.mxu0 %v461
      %v552 = vpop.f32.mrf.mxu0
      %v553 = vadd.f32 %v424, %v552
      %v554 = vpop.f32.mrf.mxu0
      %555 = vmatprep.mubr.f32.mxu0 0.0
      %556 = vmatmul.mubr.f32.gmra.mxu0 %v464
      %v557 = vpop.f32.mrf.mxu0
      %v558 = vadd.f32 %v429, %v557
      %v559 = vpop.f32.mrf.mxu0
      %560 = vmatprep.mubr.f32.mxu0 0.0
      %561 = vmatmul.mubr.f32.gmra.mxu0 %v467
      %v562 = vpop.f32.mrf.mxu0
      %v563 = vadd.f32 %v434, %v562
      %v564 = vpop.f32.mrf.mxu0
      %565 = vmatprep.mubr.f32.mxu0 0.0
      %566 = vmatmul.mubr.f32.gmra.mxu0 %v470
      %v567 = vpop.f32.mrf.mxu0
      %v568 = vadd.f32 %v439, %v567
      %v569 = vpop.f32.mrf.mxu0
      %570 = vmatprep.mubr.f32.mxu0 0.0
      %571 = vmatmul.mubr.f32.gmra.mxu0 %v473
      %v572 = vpop.f32.mrf.mxu0
      %v573 = vadd.f32 %v444, %v572
      %v574 = vpop.f32.mrf.mxu0
      %575 = vmatprep.mubr.f32.mxu0 0.0
      %576 = vmatmul.mubr.f32.gmra.mxu0 %v476
      %v577 = vpop.f32.mrf.mxu0
      %v578 = vadd.f32 %v449, %v577
      %v579 = vpop.f32.mrf.mxu0
      %580 = vmatprep.mubr.f32.mxu0 0.0
      %581 = vmatmul.mubr.f32.gmra.mxu0 %v479
      %v582 = vpop.f32.mrf.mxu0
      %v583 = vadd.f32 %v454, %v582
      %v584 = vpop.f32.mrf.mxu0
      %585 = vdwg.mxu0
      %v586 = vmax.f32 %v548, 0.0
      %v587 = vmax.f32 %v553, 0.0
      %v588 = vmax.f32 %v558, 0.0
      %v589 = vmax.f32 %v563, 0.0
      %v590 = vmax.f32 %v568, 0.0
      %v591 = vmax.f32 %v573, 0.0
      %v592 = vmax.f32 %v578, 0.0
      %v593 = vmax.f32 %v583, 0.0
      %v594 = vld [vmem:[%s5] sm:$0xff]
      %v595 = vld [vmem:[%s5 + $0x8] sm:$0xff]
      %v596 = vld [vmem:[%s5 + $0x10] sm:$0xff]
      %v597 = vld [vmem:[%s5 + $0x18] sm:$0xff]
      %v598 = vld [vmem:[%s5 + $0x20] sm:$0xff]
      %v599 = vld [vmem:[%s5 + $0x28] sm:$0xff]
      %v600 = vld [vmem:[%s5 + $0x30] sm:$0xff]
      %v601 = vld [vmem:[%s5 + $0x38] sm:$0xff]
      %v602 = vld [vmem:[%s5 + $0x40] sm:$0xff]
      %v603 = vld [vmem:[%s5 + $0x48] sm:$0xff]
      %v604 = vld [vmem:[%s5 + $0x50] sm:$0xff]
      %v605 = vld [vmem:[%s5 + $0x58] sm:$0xff]
      %v606 = vld [vmem:[%s5 + $0x60] sm:$0xff]
      %v607 = vld [vmem:[%s5 + $0x68] sm:$0xff]
      %v608 = vld [vmem:[%s5 + $0x70] sm:$0xff]
      %v609 = vld [vmem:[%s5 + $0x78] sm:$0xff]
      %v610 = vld [vmem:[%s6] sm:$0xff]
      %v611 = vld [vmem:[%s6 + $0x8] sm:$0xff]
      %v612 = vld [vmem:[%s6 + $0x10] sm:$0xff]
      %v613 = vld [vmem:[%s6 + $0x18] sm:$0xff]
      %v614 = vld [vmem:[%s6 + $0x20] sm:$0xff]
      %v615 = vld [vmem:[%s6 + $0x28] sm:$0xff]
      %v616 = vld [vmem:[%s6 + $0x30] sm:$0xff]
      %v617 = vld [vmem:[%s6 + $0x38] sm:$0xff]
      %v618 = vld [vmem:[%s6 + $0x40] sm:$0xff]
      %v619 = vld [vmem:[%s6 + $0x48] sm:$0xff]
      %v620 = vld [vmem:[%s6 + $0x50] sm:$0xff]
      %v621 = vld [vmem:[%s6 + $0x58] sm:$0xff]
      %v622 = vld [vmem:[%s6 + $0x60] sm:$0xff]
      %v623 = vld [vmem:[%s6 + $0x68] sm:$0xff]
      %v624 = vld [vmem:[%s6 + $0x70] sm:$0xff]
      %v625 = vld [vmem:[%s6 + $0x78] sm:$0xff]
      %627 = vset.pattern.permute.xlu0 0
      %628 = vperm.xlu0 %627, %v610
      %v629 = vpop.permute.xlu0 %628
      %632 = vset.pattern.permute.xlu0 0
      %633 = vperm.xlu0 %632, %v611
      %v634 = vpop.permute.xlu0 %633
      %637 = vset.pattern.permute.xlu0 0
      %638 = vperm.xlu0 %637, %v612
      %v639 = vpop.permute.xlu0 %638
      %642 = vset.pattern.permute.xlu0 0
      %643 = vperm.xlu0 %642, %v613
      %v644 = vpop.permute.xlu0 %643
      %647 = vset.pattern.permute.xlu0 0
      %648 = vperm.xlu0 %647, %v614
      %v649 = vpop.permute.xlu0 %648
      %652 = vset.pattern.permute.xlu0 0
      %653 = vperm.xlu0 %652, %v615
      %v654 = vpop.permute.xlu0 %653
      %657 = vset.pattern.permute.xlu0 0
      %658 = vperm.xlu0 %657, %v616
      %v659 = vpop.permute.xlu0 %658
      %662 = vset.pattern.permute.xlu0 0
      %663 = vperm.xlu0 %662, %v617
      %v664 = vpop.permute.xlu0 %663
      %667 = vset.pattern.permute.xlu0 0
      %668 = vperm.xlu0 %667, %v618
      %v669 = vpop.permute.xlu0 %668
      %672 = vset.pattern.permute.xlu0 0
      %673 = vperm.xlu0 %672, %v619
      %v674 = vpop.permute.xlu0 %673
      %677 = vset.pattern.permute.xlu0 0
      %678 = vperm.xlu0 %677, %v620
      %v679 = vpop.permute.xlu0 %678
      %682 = vset.pattern.permute.xlu0 0
      %683 = vperm.xlu0 %682, %v621
      %v684 = vpop.permute.xlu0 %683
      %687 = vset.pattern.permute.xlu0 0
      %688 = vperm.xlu0 %687, %v622
      %v689 = vpop.permute.xlu0 %688
      %692 = vset.pattern.permute.xlu0 0
      %693 = vperm.xlu0 %692, %v623
      %v694 = vpop.permute.xlu0 %693
      %697 = vset.pattern.permute.xlu0 0
      %698 = vperm.xlu0 %697, %v624
      %v699 = vpop.permute.xlu0 %698
      %702 = vset.pattern.permute.xlu0 0
      %703 = vperm.xlu0 %702, %v625
      %v704 = vpop.permute.xlu0 %703
      %vm706 = vcmask 523264
      %v708 = vsel %vm706, %v594, 0
      %v711 = vsel %vm706, %v595, 0
      %v714 = vsel %vm706, %v596, 0
      %v717 = vsel %vm706, %v597, 0
      %v720 = vsel %vm706, %v598, 0
      %v723 = vsel %vm706, %v599, 0
      %v726 = vsel %vm706, %v600, 0
      %v729 = vsel %vm706, %v601, 0
      %v732 = vsel %vm706, %v602, 0
      %v735 = vsel %vm706, %v603, 0
      %v738 = vsel %vm706, %v604, 0
      %v741 = vsel %vm706, %v605, 0
      %v744 = vsel %vm706, %v606, 0
      %v747 = vsel %vm706, %v607, 0
      %v750 = vsel %vm706, %v608, 0
      %v753 = vsel %vm706, %v609, 0
      %755 = vmatprep.subr.mxu0 0.0
      %756 = vmatpush1.msra.mxu0 0.0
      %757 = vmatprep.subr.mxu0 0.0
      %758 = vmatpush1.msra.mxu0 0.0
      %759 = vmatprep.subr.mxu0 0.0
      %760 = vmatpush1.msra.mxu0 0.0
      %761 = vmatprep.subr.mxu0 0.0
      %762 = vmatpush1.msra.mxu0 0.0
      %763 = vmatprep.subr.mxu0 0.0
      %764 = vmatpush1.msra.mxu0 0.0
      %765 = vmatprep.subr.mxu0 0.0
      %766 = vmatpush1.msra.mxu0 0.0
      %767 = vmatprep.subr.mxu0 0.0
      %768 = vmatpush1.msra.mxu0 0.0
      %769 = vmatprep.subr.mxu0 0.0
      %770 = vmatpush1.msra.mxu0 0.0
      %771 = vmatprep.subr.mxu0 0.0
      %772 = vmatpush1.msra.mxu0 %v593
      %773 = vmatprep.subr.mxu0 0.0
      %774 = vmatpush1.msra.mxu0 %v592
      %775 = vmatprep.subr.mxu0 0.0
      %776 = vmatpush1.msra.mxu0 %v591
      %777 = vmatprep.subr.mxu0 0.0
      %778 = vmatpush1.msra.mxu0 %v590
      %779 = vmatprep.subr.mxu0 0.0
      %780 = vmatpush1.msra.mxu0 %v589
      %781 = vmatprep.subr.mxu0 0.0
      %782 = vmatpush1.msra.mxu0 %v588
      %783 = vmatprep.subr.mxu0 0.0
      %784 = vmatpush1.msra.mxu0 %v587
      %785 = vmatprep.subr.mxu0 0.0
      %786 = vmatpush1.msra.mxu0 %v586
      %787 = vmatprep.subr.mxu0 0.0
      %788 = vmatpush2.msra.mxu0 0.0
      %789 = vmatprep.subr.mxu0 0.0
      %790 = vmatpush2.msra.mxu0 0.0
      %791 = vmatprep.subr.mxu0 0.0
      %792 = vmatpush2.msra.mxu0 0.0
      %793 = vmatprep.subr.mxu0 0.0
      %794 = vmatpush2.msra.mxu0 0.0
      %795 = vmatprep.subr.mxu0 0.0
      %796 = vmatpush2.msra.mxu0 0.0
      %797 = vmatprep.subr.mxu0 0.0
      %798 = vmatpush2.msra.mxu0 0.0
      %799 = vmatprep.subr.mxu0 0.0
      %800 = vmatpush2.msra.mxu0 0.0
      %801 = vmatprep.subr.mxu0 0.0
      %802 = vmatpush2.msra.mxu0 0.0
      %803 = vmatprep.subr.mxu0 0.0
      %804 = vmatpush2.msra.mxu0 0.0
      %805 = vmatprep.subr.mxu0 0.0
      %806 = vmatpush2.msra.mxu0 0.0
      %807 = vmatprep.subr.mxu0 0.0
      %808 = vmatpush2.msra.mxu0 0.0
      %809 = vmatprep.subr.mxu0 0.0
      %810 = vmatpush2.msra.mxu0 0.0
      %811 = vmatprep.subr.mxu0 0.0
      %812 = vmatpush2.msra.mxu0 0.0
      %813 = vmatprep.subr.mxu0 0.0
      %814 = vmatpush2.msra.mxu0 0.0
      %815 = vmatprep.subr.mxu0 0.0
      %816 = vmatpush2.msra.mxu0 0.0
      %817 = vmatprep.subr.mxu0 0.0
      %818 = vmatpush2.msra.mxu0 0.0
      %819 = vmatprep.mubr.f32.mxu0 0.0
      %820 = vmatmul.mubr.f32.gmra.mxu0 %v708
      %v821 = vpop.f32.mrf.mxu0
      %v822 = vadd.f32 %v629, %v821
      %v823 = vpop.f32.mrf.mxu0
      %824 = vmatprep.mubr.f32.mxu0 0.0
      %825 = vmatmul.mubr.f32.gmra.mxu0 %v711
      %v826 = vpop.f32.mrf.mxu0
      %v827 = vadd.f32 %v634, %v826
      %v828 = vpop.f32.mrf.mxu0
      %829 = vmatprep.mubr.f32.mxu0 0.0
      %830 = vmatmul.mubr.f32.gmra.mxu0 %v714
      %v831 = vpop.f32.mrf.mxu0
      %v832 = vadd.f32 %v639, %v831
      %v833 = vpop.f32.mrf.mxu0
      %834 = vmatprep.mubr.f32.mxu0 0.0
      %835 = vmatmul.mubr.f32.gmra.mxu0 %v717
      %v836 = vpop.f32.mrf.mxu0
      %v837 = vadd.f32 %v644, %v836
      %v838 = vpop.f32.mrf.mxu0
      %839 = vmatprep.mubr.f32.mxu0 0.0
      %840 = vmatmul.mubr.f32.gmra.mxu0 %v720
      %v841 = vpop.f32.mrf.mxu0
      %v842 = vadd.f32 %v649, %v841
      %v843 = vpop.f32.mrf.mxu0
      %844 = vmatprep.mubr.f32.mxu0 0.0
      %845 = vmatmul.mubr.f32.gmra.mxu0 %v723
      %v846 = vpop.f32.mrf.mxu0
      %v847 = vadd.f32 %v654, %v846
      %v848 = vpop.f32.mrf.mxu0
      %849 = vmatprep.mubr.f32.mxu0 0.0
      %850 = vmatmul.mubr.f32.gmra.mxu0 %v726
      %v851 = vpop.f32.mrf.mxu0
      %v852 = vadd.f32 %v659, %v851
      %v853 = vpop.f32.mrf.mxu0
      %854 = vmatprep.mubr.f32.mxu0 0.0
      %855 = vmatmul.mubr.f32.gmra.mxu0 %v729
      %v856 = vpop.f32.mrf.mxu0
      %v857 = vadd.f32 %v664, %v856
      %v858 = vpop.f32.mrf.mxu0
      %859 = vmatprep.mubr.f32.mxu0 0.0
      %860 = vmatmul.mubr.f32.gmra.mxu0 %v732
      %v861 = vpop.f32.mrf.mxu0
      %v862 = vadd.f32 %v669, %v861
      %v863 = vpop.f32.mrf.mxu0
      %864 = vmatprep.mubr.f32.mxu0 0.0
      %865 = vmatmul.mubr.f32.gmra.mxu0 %v735
      %v866 = vpop.f32.mrf.mxu0
      %v867 = vadd.f32 %v674, %v866
      %v868 = vpop.f32.mrf.mxu0
      %869 = vmatprep.mubr.f32.mxu0 0.0
      %870 = vmatmul.mubr.f32.gmra.mxu0 %v738
      %v871 = vpop.f32.mrf.mxu0
      %v872 = vadd.f32 %v679, %v871
      %v873 = vpop.f32.mrf.mxu0
      %874 = vmatprep.mubr.f32.mxu0 0.0
      %875 = vmatmul.mubr.f32.gmra.mxu0 %v741
      %v876 = vpop.f32.mrf.mxu0
      %v877 = vadd.f32 %v684, %v876
      %v878 = vpop.f32.mrf.mxu0
      %879 = vmatprep.mubr.f32.mxu0 0.0
      %880 = vmatmul.mubr.f32.gmra.mxu0 %v744
      %v881 = vpop.f32.mrf.mxu0
      %v882 = vadd.f32 %v689, %v881
      %v883 = vpop.f32.mrf.mxu0
      %884 = vmatprep.mubr.f32.mxu0 0.0
      %885 = vmatmul.mubr.f32.gmra.mxu0 %v747
      %v886 = vpop.f32.mrf.mxu0
      %v887 = vadd.f32 %v694, %v886
      %v888 = vpop.f32.mrf.mxu0
      %889 = vmatprep.mubr.f32.mxu0 0.0
      %890 = vmatmul.mubr.f32.gmra.mxu0 %v750
      %v891 = vpop.f32.mrf.mxu0
      %v892 = vadd.f32 %v699, %v891
      %v893 = vpop.f32.mrf.mxu0
      %894 = vmatprep.mubr.f32.mxu0 0.0
      %895 = vmatmul.mubr.f32.gmra.mxu0 %v753
      %v896 = vpop.f32.mrf.mxu0
      %v897 = vadd.f32 %v704, %v896
      %v898 = vpop.f32.mrf.mxu0
      %899 = vdwg.mxu0
      %vm900 = vcmask 130048
      %901 = vst.msk [vmem:[%s306] sm:$0xff] %vm900, %v822
      %902 = vst.msk [vmem:[%s306 + $0x8] sm:$0xff] %vm900, %v827
      %903 = vst.msk [vmem:[%s306 + $0x10] sm:$0xff] %vm900, %v832
      %904 = vst.msk [vmem:[%s306 + $0x18] sm:$0xff] %vm900, %v837
      %905 = vst.msk [vmem:[%s306 + $0x20] sm:$0xff] %vm900, %v842
      %906 = vst.msk [vmem:[%s306 + $0x28] sm:$0xff] %vm900, %v847
      %907 = vst.msk [vmem:[%s306 + $0x30] sm:$0xff] %vm900, %v852
      %908 = vst.msk [vmem:[%s306 + $0x38] sm:$0xff] %vm900, %v857
      %909 = vst.msk [vmem:[%s306 + $0x40] sm:$0xff] %vm900, %v862
      %910 = vst.msk [vmem:[%s306 + $0x48] sm:$0xff] %vm900, %v867
      %911 = vst.msk [vmem:[%s306 + $0x50] sm:$0xff] %vm900, %v872
      %912 = vst.msk [vmem:[%s306 + $0x58] sm:$0xff] %vm900, %v877
      %913 = vst.msk [vmem:[%s306 + $0x60] sm:$0xff] %vm900, %v882
      %914 = vst.msk [vmem:[%s306 + $0x68] sm:$0xff] %vm900, %v887
      %915 = vst.msk [vmem:[%s306 + $0x70] sm:$0xff] %vm900, %v892
      %916 = vst.msk [vmem:[%s306 + $0x78] sm:$0xff] %vm900, %v897
      %p917 = scmp.lt.s32.totalorder %s23, 1
      %s918 = scalar_select %p917, %s23, 1
      %p919 = scmp.lt.s32.totalorder %s22, 0
      %s920 = scalar_select %p919, %s22, 0
      %s921 = smul.addr %s918, 16
      %s922 = sadd.s32 %s920, %s921
      %s923 = smul.addr %s922, 8
      %s924 = scalar_lea.vmem %s7, %s923
      // Predicated region
      $region49: #{tpu_custom_call.1} parent=47 // pred_check
        %p925 = pneg %p204
      $region50: #{tpu_custom_call.1} parent=47 // pred_check_branch
        %927 = sbr.rel (%p925) target = $region52
      $region51: #{tpu_custom_call.1} parent=47 // pred_region
        _
      $region52: #{tpu_custom_call.1} parent=47 // pred_fallthru
        _
    $region48: #{tpu_custom_call.1} parent=5 // pred_fallthru
      _
    %p928 = scmp.le.s32.totalorder 2, %s13
    // Predicated region
    $region53: #{tpu_custom_call.1} parent=5 // pred_check
      %p929 = pneg %p928
    $region54: #{tpu_custom_call.1} parent=5 // pred_check_branch
      %931 = sbr.rel (%p929) target = $region56
    $region55: #{tpu_custom_call.1} parent=5 // pred_region
      %s932 = ssub.s32 %s13, 2
      // Predicated region
      $region57: #{tpu_custom_call.1} parent=55 // pred_check
        %p933 = pneg %p210
      $region58: #{tpu_custom_call.1} parent=55 // pred_check_branch
        %935 = sbr.rel (%p933) target = $region60
      $region59: #{tpu_custom_call.1} parent=55 // pred_region
        %p936 = scmp.lt.s32.totalorder %s25, 1
        %s937 = scalar_select %p936, %s25, 1
        %p938 = scmp.lt.s32.totalorder %s24, 0
        %s939 = scalar_select %p938, %s24, 0
        %s940 = smul.addr %s937, 16
        %s941 = sadd.s32 %s939, %s940
        %s942 = smul.addr %s941, 8
        %s943 = scalar_lea.vmem %s7, %s942
      $region60: #{tpu_custom_call.1} parent=55 // pred_fallthru
        _
    $region56: #{tpu_custom_call.1} parent=5 // pred_fallthru
      _
  $region6: #{tpu_custom_call.1} parent=0 // loop_footer
    %s17 = sadd.s32 1, %s13
  $region7: #{tpu_custom_call.1} parent=0 // loop_footer_branch
    %12 = sbr.rel target = $region3
  $region8: #{tpu_custom_call.1} parent=0 // loop_exit
    _

</llo_original>
